<compile_context>
chip_gen: v7x
topology: tpu7x:2x2x1
jax: 0.10.0
libtpu: 0.0.40
codegen_flags: <defaults>
</compile_context>

<pallas_src>
import functools
import itertools

import numpy as np
import jax
import jax.numpy as jnp
from jax.experimental import pallas as pl
from jax.experimental.pallas import tpu as pltpu

# ---- constants from the module -------------------------------------------
COST_CLASS = 5.0      # HungarianMatcher(cost_class=5, cost_point=1)
COST_POINT = 1.0
FOCAL_ALPHA = 0.25
FOCAL_GAMMA = 2       # realized below as (1 - p_t)^2

_VMEM = pl.BlockSpec(memory_space=pltpu.MemorySpace.VMEM)
_SMEM = pl.BlockSpec(memory_space=pltpu.MemorySpace.SMEM)


def _softplus(x):
    """Numerically stable softplus: log(1 + exp(x))."""
    return jnp.maximum(x, 0.0) + jnp.log1p(jnp.exp(-jnp.abs(x)))


def _round_up(n, m):
    return ((n + m - 1) // m) * m


# ===========================================================================
# Kernel 1: matcher cost matrix (transposed, lane-dense):
#   C^T[m, n] = COST_POINT * L1(pt_n, tpt_m) + COST_CLASS * mean_l BCE(prob_n, tgt_m)
# ===========================================================================
def _cost_matrix_kernel(logits_ref, tgt_ref, ptsT_ref, tpts_ref, ct_ref):
    x = logits_ref[...]                                    # [N, L] raw logits
    # original sets out_prob[isnan] = 0  ->  force the logit to a large negative
    # value so prob -> 0, log(prob) clamps to -100, log(1-prob) -> 0.
    x = jnp.where(jnp.isnan(x), -1.0e4, x)

    # torch BCE(prob=sigmoid(x), t) with its -100 log clamp via softplus identities:
    #   log p = -softplus(-x),  log(1-p) = -softplus(x)
    # -> one EUP softplus per element instead of sigmoid + 2x log, and no HBM
    #    round trip for a wrapper-computed sigmoid.
    sp_neg = _softplus(-x)
    logp = -jnp.minimum(sp_neg, 100.0)
    log1mp = -jnp.minimum(x + sp_neg, 100.0)

    # BCE summed over L:  -( tgt_m . (logp-log1mp)_n  +  sum_l log1mp_n )
    # Single MXU matmul; the per-n bias is a rank-1 broadcast add on the VPU
    # (no in-kernel concat / zero-padding of the contraction dim).
    d = logp - log1mp                                      # [N, L]
    s1 = jnp.sum(log1mp, axis=1)                           # [N]
    dn = (((1,), (1,)), ((), ()))                          # contract the feature dim
    td = jax.lax.dot_general(tgt_ref[...], d, dn,
                             preferred_element_type=jnp.float32)   # [Mpad, N]
    inv_l = 1.0 / x.shape[1]

    # L1 cdist (transposed): prediction coords arrive lane-dense as [2, N]
    ptsT = ptsT_ref[...]                                   # [2, N]
    tpts = tpts_ref[...]                                   # [Mpad, 2]
    cost_point_t = (jnp.abs(tpts[:, 0:1] - ptsT[0:1, :])
                    + jnp.abs(tpts[:, 1:2] - ptsT[1:2, :]))          # [Mpad, N]

    # fuse the weighted class+point sum directly into the single output store
    ct_ref[...] = (COST_POINT * cost_point_t
                   - (COST_CLASS * inv_l) * (td + s1[None, :]))


def cost_matrix_T(pred_logits_flat, tgt_ids_pad, out_point_T, tgt_point_pad):
    m_pad = tgt_ids_pad.shape[0]
    n = pred_logits_flat.shape[0]
    return pl.pallas_call(
        _cost_matrix_kernel,
        out_shape=jax.ShapeDtypeStruct((m_pad, n), jnp.float32),   # lane dim = N
        in_specs=[_VMEM, _VMEM, _VMEM, _VMEM],
        out_specs=_VMEM,
    )(pred_logits_flat, tgt_ids_pad, out_point_T, tgt_point_pad)


# ===========================================================================
# Kernel 2: background ("target = 0") focal loss over [B, Q, L],
#           gridded over B (parallel), emits per-batch lane partial sums.
#           Independent of the Hungarian matching -> dispatched pre-sync.
# ===========================================================================
def _focal_background_kernel(logits_ref, o_ref):
    x = logits_ref[...]                                    # [1, Q, L]
    sp_neg = _softplus(-x)                                 # softplus(-x)
    p = jnp.exp(-sp_neg)                                   # sigmoid(x)
    ce0 = jnp.minimum(x + sp_neg, 100.0)                   # BCE at target 0 (torch -100 log clamp)
    focal0 = (1.0 - FOCAL_ALPHA) * ce0 * (p * p)           # (1-p_t)^2 = p^2 for t=0
    o_ref[...] = jnp.sum(focal0, axis=1, keepdims=True)    # [1, 1, L] lane partial sums


def focal_background_partials(pred_logits):
    bs, nq, L = pred_logits.shape
    return pl.pallas_call(
        _focal_background_kernel,
        out_shape=jax.ShapeDtypeStruct((bs, 1, L), jnp.float32),
        grid=(bs,),
        in_specs=[pl.BlockSpec((1, nq, L), lambda b: (b, 0, 0))],
        out_specs=pl.BlockSpec((1, 1, L), lambda b: (b, 0, 0)),
        compiler_params=pltpu.CompilerParams(dimension_semantics=("parallel",)),
    )(pred_logits)


# ===========================================================================
# Kernel 3: post-sync losses that depend on the matching (all tiny):
#   [0] matched-row focal correction   [1] loss_point (L1)   [2] loss_contrast
# Scalar results go out through SMEM.
# ===========================================================================
def _matched_losses_kernel(mlog_ref, mlab_ref, mw_ref, sptsT_ref, tptsT_ref,
                           img_ref, txt_ref, wpos_ref, wneg_ref, o_ref,
                           *, inv_num_points):
    # ---------------- loss_label correction on the K matched rows ----------------
    xm = mlog_ref[...]                                     # [Kpad, L] matched logits
    tm = mlab_ref[...]                                     # [Kpad, L] matched labels
    spn = _softplus(-xm)
    pm = jnp.exp(-spn)                                     # sigmoid
    ce_pos = jnp.minimum(spn, 100.0)                       # BCE term for t=1
    ce_neg = jnp.minimum(xm + spn, 100.0)                  # BCE term for t=0
    ce = tm * ce_pos + (1.0 - tm) * ce_neg
    p_t = pm * tm + (1.0 - pm) * (1.0 - tm)
    alpha_t = FOCAL_ALPHA * tm + (1.0 - FOCAL_ALPHA) * (1.0 - tm)
    omp = 1.0 - p_t
    f = alpha_t * ce * (omp * omp)
    f0 = (1.0 - FOCAL_ALPHA) * ce_neg * (pm * pm)          # background value already counted
    # mw holds w_b = 1/(B*Q*caption_size_b) for the matched row's batch (0 for padding)
    o_ref[0] = jnp.sum((f - f0) * mw_ref[...])

    # ---------------- loss_point: L1 on transposed [2, Kpad] points ----------------
    o_ref[1] = jnp.sum(jnp.abs(sptsT_ref[...] - tptsT_ref[...])) * inv_num_points

    # ---------------- loss_contrast ----------------
    img = img_ref[...]                                     # [Ncap, Kmax8, D]
    ncap, kmax, dd = img.shape
    # F.normalize(p=2, dim=-1) via rsqrt (1/max(||v||,1e-12) == rsqrt(max(||v||^2,1e-24)))
    inv = jax.lax.rsqrt(jnp.maximum(jnp.sum(img * img, axis=2, keepdims=True), 1e-24))
    img_n = (img * inv).reshape(ncap * kmax, dd)           # layout-free: Kmax8 % 8 == 0
    dn = (((1,), (1,)), ((), ()))
    sims = jax.lax.dot_general(img_n, txt_ref[...], dn,
                               preferred_element_type=jnp.float32)   # [Ncap*Kmax8, Ncap]
    # BCE-with-logits: label 1 -> softplus(-s), label 0 -> softplus(s).
    # wpos/wneg (host precomputed) fold padded-row masking, pos/neg column selection,
    # the per-instance means and the final 1/Ncap average.
    o_ref[2] = jnp.sum(_softplus(-sims) * wpos_ref[...]
                       + _softplus(sims) * wneg_ref[...])


def matched_losses(matched_logits, matched_labels, matched_w, sptsT, tptsT,
                   num_points, img_tok, txt_norm, wpos, wneg):
    return pl.pallas_call(
        functools.partial(_matched_losses_kernel,
                          inv_num_points=1.0 / float(num_points)),
        out_shape=jax.ShapeDtypeStruct((3,), jnp.float32),
        in_specs=[_VMEM] * 9,
        out_specs=_SMEM,                                   # scalar results via SMEM
    )(matched_logits, matched_labels, matched_w, sptsT, tptsT,
      img_tok, txt_norm, wpos, wneg)


# ===========================================================================
# Host-side Hungarian assignment (exact brute force for small problems)
# ===========================================================================
# TODO(synk): scipy.optimize.linear_sum_assignment has no Pallas equivalent;
#             exact brute-force search on host (valid for small num_targets).
def _hungarian_host(cost):
    nq, nt = cost.shape
    best_rows, best_cost = None, None
    for rows in itertools.permutations(range(nq), nt):
        c = sum(cost[rows[j], j] for j in range(nt))
        if best_cost is None or c < best_cost:
            best_cost, best_rows = c, rows
    rows = np.asarray(best_rows, dtype=np.int64)
    cols = np.arange(nt, dtype=np.int64)
    order = np.argsort(rows)                 # scipy returns rows sorted ascending
    return rows[order], cols[order]


# ===========================================================================
# SetCriterion.forward equivalent
# ===========================================================================
def set_criterion_forward(outputs, targets, mask_bi):
    pred_logits = outputs['pred_logits']                  # [B, Q, L]
    pred_points = outputs['pred_points']                  # [B, Q, 2]
    bs, nq, L = pred_logits.shape

    # ------- dispatch everything independent of the matcher indices first -------
    logits_flat = pred_logits.reshape(bs * nq, L)
    out_point_T = pred_points.reshape(bs * nq, 2).T                    # [2, N]

    sizes = [int(t['points'].shape[0]) for t in targets]
    m = sum(sizes)
    m_pad = max(8, _round_up(m, 8))                        # sublane-dense target rows
    tgt_ids = jnp.concatenate([t['labels'] for t in targets], axis=0).astype(jnp.float32)
    tgt_point = jnp.concatenate([t['points'] for t in targets], axis=0).astype(jnp.float32)
    tgt_ids_pad = jnp.zeros((m_pad, L), jnp.float32).at[:m].set(tgt_ids)
    tgt_point_pad = jnp.zeros((m_pad, 2), jnp.float32).at[:m].set(tgt_point)

    Ct = cost_matrix_T(logits_flat, tgt_ids_pad, out_point_T, tgt_point_pad)   # Pallas (async)

    # background part of the focal loss (target-independent) -> overlaps the matcher
    focal_bg = focal_background_partials(pred_logits)                  # [B, 1, L] (async)

    caption_sizes = jnp.stack([t['caption_size'] for t in targets]).astype(jnp.float32)
    focal_w = 1.0 / (caption_sizes * float(nq * bs))                   # [B]

    img_embs = outputs['img_embs']                        # [Ncap, Q, D]
    txt_embs = outputs['txt_embs']                        # [Ncap, T, D]
    token_masks = outputs['token_masks'].astype(jnp.float32)
    # masked mean-pool + L2 normalize of text tokens (independent of matching).
    # 1e-6 guards an all-zero token mask.
    denom = jnp.maximum(jnp.sum(token_masks, axis=1, keepdims=True), 1e-6)
    pooled = jnp.sum(txt_embs * token_masks[..., None], axis=1) / denom
    txt_norm = pooled * jax.lax.rsqrt(
        jnp.maximum(jnp.sum(pooled * pooled, axis=1, keepdims=True), 1e-24))

    num_points = float(max(sum(int(t['labels'].shape[0]) for t in targets), 1))

    # contrastive weight masks (depend only on mask_bi / sizes, not on matching)
    ncap = int(img_embs.shape[0])
    mask_bi_arr = np.asarray(mask_bi)
    kmax = max(1, max(sizes[int(b)] for b in mask_bi_arr))
    kmax = _round_up(kmax, 8)                              # layout-free in-kernel reshape
    wpos = np.zeros((ncap * kmax, ncap), np.float32)
    wneg = np.zeros((ncap * kmax, ncap), np.float32)
    for i in range(ncap):
        bi = int(mask_bi_arr[i])
        ki = sizes[bi]
        negs = [j for j in range(ncap) if int(mask_bi_arr[j]) == bi and j != i]
        if ki == 0 or len(negs) == 0:
            continue                                      # instance contributes 0
        rs = slice(i * kmax, i * kmax + ki)
        wpos[rs, i] = 0.5 / (ncap * ki)
        for j in negs:
            wneg[rs, j] = 0.5 / (ncap * ki * len(negs))

    # ---------------- host sync: Hungarian matcher ----------------
    C_np = np.asarray(jax.device_get(Ct))[:m].T.reshape(bs, nq, m)     # [B, Q, M]
    indices, start = [], 0
    for b in range(bs):
        sub = C_np[b][:, start:start + sizes[b]]
        indices.append(_hungarian_host(sub))
        start += sizes[b]

    batch_idx = np.concatenate([np.full_like(src, b)
                                for b, (src, _) in enumerate(indices)])
    src_idx = np.concatenate([src for src, _ in indices])
    k = int(batch_idx.shape[0])
    k_pad = max(8, _round_up(k, 8))

    # ---------------- gathers that depend on the matching (K rows, tiny) ----------------
    target_classes_o = jnp.concatenate(
        [t['labels'][np.asarray(J)] for t, (_, J) in zip(targets, indices)], axis=0)
    # mirrors the original .to(torch.int64).type_as(src_logits) cast
    target_classes_o = target_classes_o.astype(jnp.int32).astype(jnp.float32)
    matched_logits = jnp.zeros((k_pad, L), jnp.float32).at[:k].set(
        pred_logits[batch_idx, src_idx])
    matched_labels = jnp.zeros((k_pad, L), jnp.float32).at[:k].set(target_classes_o)
    matched_w = jnp.zeros((k_pad, 1), jnp.float32).at[:k, 0].set(focal_w[batch_idx])

    src_points = pred_points[batch_idx, src_idx]                        # [K, 2]
    target_points = jnp.concatenate(
        [t['points'][np.asarray(J)] for t, (_, J) in zip(targets, indices)],
        axis=0).astype(jnp.float32)
    sptsT = jnp.zeros((2, k_pad), jnp.float32).at[:, :k].set(src_points.T)
    tptsT = jnp.zeros((2, k_pad), jnp.float32).at[:, :k].set(target_points.T)

    gather_idx = np.zeros((ncap, kmax), np.int32)
    for i in range(ncap):
        sel = src_idx[batch_idx == int(mask_bi_arr[i])]
        gather_idx[i, :len(sel)] = sel
    img_tok = img_embs[jnp.arange(ncap)[:, None], jnp.asarray(gather_idx)]  # [Ncap,Kmax8,D]

    # ---------------- small post-sync loss kernel ----------------
    # (when Ncap == 1 there are no negatives -> wpos/wneg are all zero and the
    #  contrastive term is exactly 0, matching the module's early return)
    corr = matched_losses(matched_logits, matched_labels, matched_w, sptsT, tptsT,
                          num_points, img_tok, txt_norm,
                          jnp.asarray(wpos), jnp.asarray(wneg))

    # loss_label = sum_b w_b * (background focal partials of block b) + matched correction
    loss_label = jnp.sum(jnp.sum(focal_bg[:, 0, :], axis=-1) * focal_w) + corr[0]
    loss_point = corr[1]
    loss_contrast = corr[2]

    # TODO(synk): the original forward mutates outputs['pred_points']/['pred_logits']
    #             in place by swapping matched rows; this has no effect on the
    #             returned losses and is omitted here.
    return {'loss_label': loss_label,
            'loss_point': loss_point,
            'loss_contrast': loss_contrast}


# ===========================================================================
if __name__ == "__main__":
    key = jax.random.PRNGKey(0)
    bs, nq, L, D, T = 2, 8, 32, 32, 16
    ks = jax.random.split(key, 10)

    pred_logits = jax.random.normal(ks[0], (bs, nq, L), jnp.float32)
    pred_points = jax.random.uniform(ks[1], (bs, nq, 2), dtype=jnp.float32)
    img_embs = jax.random.normal(ks[2], (bs, nq, D), jnp.float32)
    txt_embs = jax.random.normal(ks[3], (bs, T, D), jnp.float32)
    token_masks = (jnp.arange(T)[None, :] < jnp.array([[10], [12]])).astype(jnp.float32)

    sizes = [2, 3]
    targets = []
    for b, n in enumerate(sizes):
        labels = jax.random.bernoulli(ks[4 + b], 0.3, (n, L)).astype(jnp.float32)
        points = jax.random.uniform(ks[6 + b], (n, 2), dtype=jnp.float32)
        targets.append({'labels': labels,
                        'points': points,
                        'caption_size': jnp.float32(20.0 + 4.0 * b)})

    outputs = {'pred_logits': pred_logits,
               'pred_points': pred_points,
               'img_embs': img_embs,
               'txt_embs': txt_embs,
               'token_masks': token_masks}
    mask_bi = [0, 0]   # both caption instances belong to image 0 -> negatives exist

    losses = set_criterion_forward(outputs, targets, mask_bi)
    losses = jax.block_until_ready(losses)
    for name, v in losses.items():
        assert np.isfinite(float(v)), f"non-finite {name}"
    print("KERNEL_OK")
</pallas_src>

<mosaic_0001>
module attributes {stable_mosaic.version = 11 : i64} {
  func.func @_cost_matrix_kernel(%arg0: memref<16x32xf32, #tpu.memory_space<vmem>>, %arg1: memref<8x32xf32, #tpu.memory_space<vmem>>, %arg2: memref<2x16xf32, #tpu.memory_space<vmem>>, %arg3: memref<8x2xf32, #tpu.memory_space<vmem>>, %arg4: memref<8x16xf32, #tpu.memory_space<vmem>>) attributes {dimension_semantics = [], scalar_prefetch = 0 : i64, scratch_operands = 0 : i64, tpu.core_type = #tpu.core_type<tc>} {
    %c0 = arith.constant 0 : index
    %c0_0 = arith.constant 0 : index
    %0 = vector.load %arg0[%c0, %c0_0] : memref<16x32xf32, #tpu.memory_space<vmem>>, vector<16x32xf32>
    %1 = arith.cmpf one, %0, %0 : vector<16x32xf32>
    %cst = arith.constant -1.000000e+04 : f32
    %2 = vector.broadcast %cst : f32 to vector<16x32xf32>
    %3 = arith.select %1, %2, %0 : vector<16x32xi1>, vector<16x32xf32>
    %cst_1 = arith.constant 0.000000e+00 : f32
    %4 = vector.broadcast %cst_1 : f32 to vector<16x32xf32>
    %5 = arith.subf %4, %3 : vector<16x32xf32>
    %cst_2 = arith.constant 0.000000e+00 : f32
    %6 = vector.broadcast %cst_2 : f32 to vector<16x32xf32>
    %7 = arith.maximumf %5, %6 : vector<16x32xf32>
    %8 = math.absf %5 : vector<16x32xf32>
    %cst_3 = arith.constant 0.000000e+00 : f32
    %9 = vector.broadcast %cst_3 : f32 to vector<16x32xf32>
    %10 = arith.subf %9, %8 : vector<16x32xf32>
    %11 = math.exp %10 : vector<16x32xf32>
    %12 = math.log1p %11 : vector<16x32xf32>
    %13 = arith.addf %7, %12 : vector<16x32xf32>
    %cst_4 = arith.constant 1.000000e+02 : f32
    %14 = vector.broadcast %cst_4 : f32 to vector<16x32xf32>
    %15 = arith.minimumf %13, %14 : vector<16x32xf32>
    %cst_5 = arith.constant 0.000000e+00 : f32
    %16 = vector.broadcast %cst_5 : f32 to vector<16x32xf32>
    %17 = arith.subf %16, %15 : vector<16x32xf32>
    %18 = arith.addf %3, %13 : vector<16x32xf32>
    %cst_6 = arith.constant 1.000000e+02 : f32
    %19 = vector.broadcast %cst_6 : f32 to vector<16x32xf32>
    %20 = arith.minimumf %18, %19 : vector<16x32xf32>
    %cst_7 = arith.constant 0.000000e+00 : f32
    %21 = vector.broadcast %cst_7 : f32 to vector<16x32xf32>
    %22 = arith.subf %21, %20 : vector<16x32xf32>
    %23 = arith.subf %17, %22 : vector<16x32xf32>
    %cst_8 = arith.constant dense<0.000000e+00> : vector<16xf32>
    %24 = vector.multi_reduction <add>, %22, %cst_8 [1] : vector<16x32xf32> to vector<16xf32>
    %c0_9 = arith.constant 0 : index
    %c0_10 = arith.constant 0 : index
    %25 = vector.load %arg1[%c0_9, %c0_10] : memref<8x32xf32, #tpu.memory_space<vmem>>, vector<8x32xf32>
    %cst_11 = arith.constant dense<0.000000e+00> : vector<8x16xf32>
    %26 = tpu.matmul %25, %23, %cst_11 {dimension_numbers = #tpu.dot_dimension_numbers<[1], [1], [0], [0], [0, 0, 1, 0], [], []>} : vector<8x32xf32>, vector<16x32xf32>, vector<8x16xf32> -> vector<8x16xf32>
    %c0_12 = arith.constant 0 : index
    %c0_13 = arith.constant 0 : index
    %27 = vector.load %arg2[%c0_12, %c0_13] : memref<2x16xf32, #tpu.memory_space<vmem>>, vector<2x16xf32>
    %c0_14 = arith.constant 0 : index
    %c0_15 = arith.constant 0 : index
    %28 = vector.load %arg3[%c0_14, %c0_15] : memref<8x2xf32, #tpu.memory_space<vmem>>, vector<8x2xf32>
    %29 = vector.extract_strided_slice %28 {offsets = [0, 0], sizes = [8, 1], strides = [1, 1]} : vector<8x2xf32> to vector<8x1xf32>
    %30 = vector.extract_strided_slice %27 {offsets = [0, 0], sizes = [1, 16], strides = [1, 1]} : vector<2x16xf32> to vector<1x16xf32>
    %31 = vector.broadcast %29 : vector<8x1xf32> to vector<8x16xf32>
    %32 = vector.broadcast %30 : vector<1x16xf32> to vector<8x16xf32>
    %33 = arith.subf %31, %32 : vector<8x16xf32>
    %34 = math.absf %33 : vector<8x16xf32>
    %35 = vector.extract_strided_slice %28 {offsets = [0, 1], sizes = [8, 1], strides = [1, 1]} : vector<8x2xf32> to vector<8x1xf32>
    %36 = vector.extract_strided_slice %27 {offsets = [1, 0], sizes = [1, 16], strides = [1, 1]} : vector<2x16xf32> to vector<1x16xf32>
    %37 = vector.broadcast %35 : vector<8x1xf32> to vector<8x16xf32>
    %38 = vector.broadcast %36 : vector<1x16xf32> to vector<8x16xf32>
    %39 = arith.subf %37, %38 : vector<8x16xf32>
    %40 = math.absf %39 : vector<8x16xf32>
    %41 = arith.addf %34, %40 : vector<8x16xf32>
    %cst_16 = arith.constant 1.000000e+00 : f32
    %42 = vector.broadcast %cst_16 : f32 to vector<8x16xf32>
    %43 = arith.mulf %42, %41 : vector<8x16xf32>
    %44 = vector.shape_cast %24 : vector<16xf32> to vector<1x16xf32>
    %45 = vector.broadcast %44 : vector<1x16xf32> to vector<8x16xf32>
    %46 = arith.addf %26, %45 : vector<8x16xf32>
    %cst_17 = arith.constant 1.562500e-01 : f32
    %47 = vector.broadcast %cst_17 : f32 to vector<8x16xf32>
    %48 = arith.mulf %47, %46 : vector<8x16xf32>
    %49 = arith.subf %43, %48 : vector<8x16xf32>
    %c0_18 = arith.constant 0 : index
    %c0_19 = arith.constant 0 : index
    %50 = vector.load %arg4[%c0_18, %c0_19] : memref<8x16xf32, #tpu.memory_space<vmem>>, vector<8x16xf32>
    tpu.vector_store %arg4[%c0_18, %c0_19], %49 {strides = array<i32>} : memref<8x16xf32, #tpu.memory_space<vmem>>, vector<8x16xf32>,
    return
  }
}

</mosaic_0001>

<llo_original>
// kernel: tpu_custom_call.1
$region0: #{tpu_custom_call.1}
  #allocation0 [shape = 'u32[]', space=smem, size = 0x4, offset = 0x4, fixed_abs, tag = 'smem constant byte address 0x4 - core index']
  #allocation1 [shape = 'u32[144,128]{1,0:T(1,128)}', space=vmem, size = 0x12000, scoped, tag = 'internal scratch']
  %s0 = inlined_call_operand.hbm [shape: f32[16,32], index: 0, kind: input, shape index: {}]
  %s1 = inlined_call_operand.vmem [shape: f32[8,32], index: 1, kind: input, shape index: {}]
  %s2 = inlined_call_operand.vmem [shape: f32[2,16], index: 2, kind: input, shape index: {}]
  %s3 = inlined_call_operand.vmem [shape: f32[8,2], index: 3, kind: input, shape index: {}]
  %s4 = inlined_call_operand.hbm [shape: f32[8,16], index: 4, kind: output, shape index: {}]
  %s5 = sld [smem:[#allocation0]]
  $region30: #{tpu_custom_call.1} parent=0
    _
  %s7 = ssub.s32 1, %s5
  %s8 = scalar_select 0, %s7, %s5
  $region1: #{tpu_custom_call.1} parent=0
    #allocation2 [shape = 'u8[8192]{0}', space=vmem, size = 0x2000, scoped, tag = 'input window, operand 0, single buffered']
    #allocation3 [shape = 's32[1]{0}', space=sflag, size = 0x4, scoped, tag = 'scoped memory for tpu_custom_call.1']
    #allocation4 [shape = 's32[1]{0}', space=sflag, size = 0x4, scoped, tag = 'scoped memory for tpu_custom_call.1']
    #allocation5 [shape = 'u8[4096]{0}', space=vmem, size = 0x1000, scoped, tag = 'output window, operand 0, single buffered']
    %9 = vsyncpa [#allocation3], 0
    %10 = vsyncpa [#allocation4], 0
    // Predicated region
    $region2: #{tpu_custom_call.1} parent=1 // pred_check
      _
    $region3: #{tpu_custom_call.1} parent=1 // pred_check_branch
      %12 = sbr.rel (0) target = $region5
    $region4: #{tpu_custom_call.1} parent=1 // pred_region
      %s14 = ssub.s32 256, 256
      %15 = vsyncadd [#allocation3], %s14
      %s16 = sshll.u32 [#allocation2], 4
      %s17 = int_to_ptr.vmem [resolvable:$true] %s16
      %22 = dma.hbm_to_vmem [thread:$0]  %s0, 256, %s17, [#allocation3], 128, 128, 8
    $region5: #{tpu_custom_call.1} parent=1 // pred_fallthru
      _
    // Predicated region
    $region6: #{tpu_custom_call.1} parent=1 // pred_check
      _
    $region7: #{tpu_custom_call.1} parent=1 // pred_check_branch
      %24 = sbr.rel (0) target = $region9
    $region8: #{tpu_custom_call.1} parent=1 // pred_region
      _
    $region9: #{tpu_custom_call.1} parent=1 // pred_fallthru
      _
    // Predicated region
    $region10: #{tpu_custom_call.1} parent=1 // pred_check
      _
    $region11: #{tpu_custom_call.1} parent=1 // pred_check_branch
      %26 = sbr.rel (0) target = $region13
    $region12: #{tpu_custom_call.1} parent=1 // pred_region
      _
    $region13: #{tpu_custom_call.1} parent=1 // pred_fallthru
      _
    // Predicated region
    $region14: #{tpu_custom_call.1} parent=1 // pred_check
      _
    $region15: #{tpu_custom_call.1} parent=1 // pred_check_branch
      %28 = sbr.rel (0) target = $region17
    $region16: #{tpu_custom_call.1} parent=1 // pred_region
      _
    $region17: #{tpu_custom_call.1} parent=1 // pred_fallthru
      _
    // Predicated region
    $region18: #{tpu_custom_call.1} parent=1 // pred_check
      _
    $region19: #{tpu_custom_call.1} parent=1 // pred_check_branch
      %30 = sbr.rel (0) target = $region21
    $region20: #{tpu_custom_call.1} parent=1 // pred_region
      %31 = dma.done [#allocation3], 256
    $region21: #{tpu_custom_call.1} parent=1 // pred_fallthru
      _
    %v32 = vld [vmem:[#allocation2] sm:$0xff]
    %v33 = vld [vmem:[#allocation2 + $0x8] sm:$0xff]
    %vm34 = vcmp.ne.f32.partialorder %v32, %v32
    %vm35 = vcmp.ne.f32.partialorder %v33, %v33
    %v36 = vsel %vm34, -10000.0, %v32
    %v37 = vsel %vm35, -10000.0, %v33
    %v38 = vsub.f32 0.0, %v36
    %v39 = vsub.f32 0.0, %v37
    %v40 = vmax.f32 %v38, 0.0
    %v41 = vmax.f32 %v39, 0.0
    %v42 = vand.u32 2147483647, %v38
    %v43 = vand.u32 2147483647, %v39
    %v44 = vsub.f32 0.0, %v42
    %v45 = vsub.f32 0.0, %v43
    %v46 = vmul.f32 %v44, 1.442695
    %v47 = vpow.pop %v46
    %v48 = vmul.f32 %v45, 1.442695
    %v49 = vpow.pop %v48
    %v50 = vadd.f32 %v47, 1.0
    %v51 = vlog2.pop %v50
    %v52 = vmul.f32 %v51, 0.6931472
    %v53 = vmul.f32 -0.5, %v47
    %v54 = vadd.f32 %v53, 1.0
    %v55 = vmul.f32 %v54, %v47
    %v56 = vand.u32 2147483647, %v47
    %vm57 = vcmp.lt.f32.partialorder %v56, 0.0004427343
    %v58 = vsel %vm57, %v55, %v52
    %v59 = vadd.f32 %v49, 1.0
    %v60 = vlog2.pop %v59
    %v61 = vmul.f32 %v60, 0.6931472
    %v62 = vmul.f32 -0.5, %v49
    %v63 = vadd.f32 %v62, 1.0
    %v64 = vmul.f32 %v63, %v49
    %v65 = vand.u32 2147483647, %v49
    %vm66 = vcmp.lt.f32.partialorder %v65, 0.0004427343
    %v67 = vsel %vm66, %v64, %v61
    %v68 = vadd.f32 %v40, %v58
    %v69 = vadd.f32 %v41, %v67
    %v70 = vmin.f32 %v68, 100.0
    %v71 = vmin.f32 %v69, 100.0
    %v72 = vsub.f32 0.0, %v70
    %v73 = vsub.f32 0.0, %v71
    %v74 = vadd.f32 %v36, %v68
    %v75 = vadd.f32 %v37, %v69
    %v76 = vmin.f32 %v74, 100.0
    %v77 = vmin.f32 %v75, 100.0
    %v78 = vsub.f32 0.0, %v76
    %v79 = vsub.f32 0.0, %v77
    %v80 = vsub.f32 %v72, %v78
    %v81 = vsub.f32 %v73, %v79
    %vm82 = vcmask 261120
    %v83 = vsel %vm82, %v78, 0.0
    %84 = vadd.xlane.f32.xlu0 %v83
    %v85 = vpop.xlane.xlu0 %84
    %v86 = vsel %vm82, %v79, 0.0
    %87 = vadd.xlane.f32.xlu0 %v86
    %v88 = vpop.xlane.xlu0 %87
    %v89 = vld [vmem:[%s1] sm:$0xff]
    %v90 = vld [vmem:[%s2] sm:$0x3]
    %v91 = vld [vmem:[%s3] sm:$0xff]
    %93 = vset.pattern.permute.xlu0 0
    %94 = vperm.xlu0 %93, %v91
    %v95 = vpop.permute.xlu0 %94
    %v97 = vlaneseq
    %v98 = vshrl.u32 %v97, 7
    %v99 = vsub.s32 0, %v98
    %v100 = vrot.slane %v90, %v99
    %v101 = vsub.f32 %v95, %v100
    %v102 = vand.u32 2147483647, %v101
    %103 = vset.pattern.permute.xlu0 1
    %104 = vperm.xlu0 %103, %v91
    %v105 = vpop.permute.xlu0 %104
    %v107 = vlaneseq
    %v108 = vshrl.u32 %v107, 7
    %v109 = vsub.s32 1, %v108
    %v110 = vrot.slane %v90, %v109
    %v111 = vsub.f32 %v105, %v110
    %v112 = vand.u32 2147483647, %v111
    %v113 = vadd.f32 %v102, %v112
    %v116 = vlaneseq
    %v117 = vand.u32 %v116, 127
    %v118 = vlaneseq
    %v119 = vshrl.u32 %v118, 7
    %v120 = vsub.s32 %v117, %v119
    %v121 = vrot.slane %v85, %v120
    %v122 = vadd.s32 %v117, 4294967288
    %v123 = vlaneseq
    %v124 = vshrl.u32 %v123, 7
    %v125 = vsub.s32 %v122, %v124
    %v126 = vrot.slane %v88, %v125
    %vm127 = vcmask 130112
    %v128 = vsel %vm127, %v126, %v121
    %vm129 = vcmask 1042434
    %v130 = vsel %vm129, %v128, %v128
    %vm131 = vcmask 1043459
    %v132 = vsel %vm131, %v128, %v130
    %vm133 = vcmask 1044484
    %v134 = vsel %vm133, %v128, %v132
    %vm135 = vcmask 1045509
    %v136 = vsel %vm135, %v128, %v134
    %vm137 = vcmask 1046534
    %v138 = vsel %vm137, %v128, %v136
    %vm139 = vcmask 1047559
    %v140 = vsel %vm139, %v128, %v138
    %v143 = vsel %vm82, %v89, 0
    %v146 = vsel %vm82, %v80, 0
    %v149 = vsel %vm82, %v81, 0
    %151 = vmatprep.subr.mxu0 0.0
    %152 = vmatpush1.xpose.msra.mxu0 %v146
    %153 = vmatprep.subr.mxu0 0.0
    %154 = vmatpush1.xpose.msra.mxu0 %v149
    %155 = vmatprep.subr.mxu0 0.0
    %156 = vmatpush1.xpose.msra.mxu0 0.0
    %157 = vmatprep.subr.mxu0 0.0
    %158 = vmatpush1.xpose.msra.mxu0 0.0
    %159 = vmatprep.subr.mxu0 0.0
    %160 = vmatpush1.xpose.msra.mxu0 0.0
    %161 = vmatprep.subr.mxu0 0.0
    %162 = vmatpush1.xpose.msra.mxu0 0.0
    %163 = vmatprep.subr.mxu0 0.0
    %164 = vmatpush1.xpose.msra.mxu0 0.0
    %165 = vmatprep.subr.mxu0 0.0
    %166 = vmatpush1.xpose.msra.mxu0 0.0
    %167 = vmatprep.subr.mxu0 0.0
    %168 = vmatpush1.xpose.msra.mxu0 0.0
    %169 = vmatprep.subr.mxu0 0.0
    %170 = vmatpush1.xpose.msra.mxu0 0.0
    %171 = vmatprep.subr.mxu0 0.0
    %172 = vmatpush1.xpose.msra.mxu0 0.0
    %173 = vmatprep.subr.mxu0 0.0
    %174 = vmatpush1.xpose.msra.mxu0 0.0
    %175 = vmatprep.subr.mxu0 0.0
    %176 = vmatpush1.xpose.msra.mxu0 0.0
    %177 = vmatprep.subr.mxu0 0.0
    %178 = vmatpush1.xpose.msra.mxu0 0.0
    %179 = vmatprep.subr.mxu0 0.0
    %180 = vmatpush1.xpose.msra.mxu0 0.0
    %181 = vmatprep.subr.mxu0 0.0
    %182 = vmatpush1.xpose.msra.mxu0 0.0
    %183 = vmatprep.subr.mxu0 0.0
    %184 = vmatpush1.xpose.msra.mxu0 0.0
    %185 = vmatprep.subr.mxu0 0.0
    %186 = vmatpush1.xpose.msra.mxu0 0.0
    %187 = vmatprep.subr.mxu0 0.0
    %188 = vmatpush1.xpose.msra.mxu0 0.0
    %189 = vmatprep.subr.mxu0 0.0
    %190 = vmatpush1.xpose.msra.mxu0 0.0
    %191 = vmatprep.subr.mxu0 0.0
    %192 = vmatpush1.xpose.msra.mxu0 0.0
    %193 = vmatprep.subr.mxu0 0.0
    %194 = vmatpush1.xpose.msra.mxu0 0.0
    %195 = vmatprep.subr.mxu0 0.0
    %196 = vmatpush1.xpose.msra.mxu0 0.0
    %197 = vmatprep.subr.mxu0 0.0
    %198 = vmatpush1.xpose.msra.mxu0 0.0
    %199 = vmatprep.subr.mxu0 0.0
    %200 = vmatpush1.xpose.msra.mxu0 0.0
    %201 = vmatprep.subr.mxu0 0.0
    %202 = vmatpush1.xpose.msra.mxu0 0.0
    %203 = vmatprep.subr.mxu0 0.0
    %204 = vmatpush1.xpose.msra.mxu0 0.0
    %205 = vmatprep.subr.mxu0 0.0
    %206 = vmatpush1.xpose.msra.mxu0 0.0
    %207 = vmatprep.subr.mxu0 0.0
    %208 = vmatpush1.xpose.msra.mxu0 0.0
    %209 = vmatprep.subr.mxu0 0.0
    %210 = vmatpush1.xpose.msra.mxu0 0.0
    %211 = vmatprep.subr.mxu0 0.0
    %212 = vmatpush1.xpose.msra.mxu0 0.0
    %213 = vmatprep.subr.mxu0 0.0
    %214 = vmatpush1.xpose.msra.mxu0 0.0
    %215 = vmatprep.mubr.f32.mxu0 0.0
    %216 = vmatmul.mubr.f32.gmra.mrb[0].mxu0 %v143
    %v217 = vpop.f32.mrb[0].mxu0
    %v218 = vadd.f32 %v140, %v217
    %v219 = vpop.f32.mrb[0].mxu0
    %220 = vdwg.mxu0
    %v221 = vmul.f32 %v218, 0.15625
    %v222 = vsub.f32 %v113, %v221
    %vm223 = vcmask 130048
    %224 = vst.msk [vmem:[#allocation5] sm:$0xff] %vm223, %v222
    // Predicated region
    $region22: #{tpu_custom_call.1} parent=1 // pred_check
      _
    $region23: #{tpu_custom_call.1} parent=1 // pred_check_branch
      %226 = sbr.rel (0) target = $region25
    $region24: #{tpu_custom_call.1} parent=1 // pred_region
      %s228 = ssub.s32 128, 128
      %229 = vsyncadd [#allocation4], %s228
      %s231 = sshll.u32 [#allocation5], 4
      %s232 = int_to_ptr.vmem [resolvable:$true] %s231
      %234 = dma.vmem_to_hbm [thread:$0]  %s232, 128, %s4, [#allocation4]
    $region25: #{tpu_custom_call.1} parent=1 // pred_fallthru
      _
    // Predicated region
    $region26: #{tpu_custom_call.1} parent=1 // pred_check
      _
    $region27: #{tpu_custom_call.1} parent=1 // pred_check_branch
      %236 = sbr.rel (0) target = $region29
    $region28: #{tpu_custom_call.1} parent=1 // pred_region
      %237 = dma.done [#allocation4], 128
    $region29: #{tpu_custom_call.1} parent=1 // pred_fallthru
      _
    %238 = vsyncpa [#allocation3], 1
    %239 = vsyncpa [#allocation4], 1

</llo_original>
